<compile_context>
chip_gen: v7x
topology: tpu7x:2x2x1
jax: 0.10.0
libtpu: 0.0.40
codegen_flags: <defaults>
</compile_context>

<pallas_src>
import jax
import jax.numpy as jnp
from jax.experimental import pallas as pl
from jax.experimental.pallas import tpu as pltpu

LANE = 128
NEG_BIG = -1e30           # bias for padded classifier lanes -> exp underflows to 0
MXU_DTYPE = jnp.bfloat16  # MXU-native operand dtype (accumulate in f32)


# ----------------------------- fused Pallas kernel -----------------------------

def _make_fused_kernel(arch, mlp_indices):
    """Build the single fused forward kernel for a fixed arch (unrolled at trace)."""
    arch = tuple(arch)
    mlp_indices = tuple(mlp_indices)
    n_mlp = len(mlp_indices)

    def kernel(*refs):
        adj_ref, s0_ref, w_pre_ref, b_pre_ref = refs[:4]
        mlp_refs = refs[4:4 + 2 * n_mlp]
        w_cls_ref, b_cls_ref, gate_ref = refs[4 + 2 * n_mlp:4 + 2 * n_mlp + 3]
        o_ref = refs[-1]

        mlp_w = {idx: mlp_refs[2 * s] for s, idx in enumerate(mlp_indices)}
        mlp_b = {idx: mlp_refs[2 * s + 1] for s, idx in enumerate(mlp_indices)}

        def mm(a, b):  # MXU matmul: bf16 operands, f32 accumulation
            return jnp.dot(a.astype(MXU_DTYPE), b.astype(MXU_DTYPE),
                           preferred_element_type=jnp.float32)

        def linear(x, w, b, relu):
            y = mm(x, w) + b
            return jnp.maximum(y, 0.0) if relu else y

        # Load shared operands once; they stay vreg/VMEM resident across the
        # whole unrolled arch loop.
        adj = adj_ref[...]
        s0 = s0_ref[...]
        w_pre = w_pre_ref[...]
        b_pre = b_pre_ref[...].astype(jnp.float32)
        w_cls = w_cls_ref[...]
        b_cls = b_cls_ref[...].astype(jnp.float32)

        def gated(idx, x):
            # sigmoid(gate[idx]) * x : gate scalar read from SMEM, sigmoid
            # evaluated as a (1, H) vector on the EUP, then a bias-style
            # sublane-broadcast multiply on the VPU (f32 throughout).
            g = gate_ref[idx]
            s = 1.0 / (1.0 + jnp.exp(jnp.full((1, x.shape[1]), -g, jnp.float32)))
            return s * x

        def op(i, x):
            if arch[i] == 1:                              # Graph: adj @ x
                return mm(adj, x)
            return linear(x, mlp_w[i][...],               # MLP: relu(linear(x))
                          mlp_b[i][...].astype(jnp.float32), relu=True)

        # TODO(synk): F.dropout uses training-mode randomness in the reference;
        # implemented here with eval-mode semantics (identity).
        # -------- verbatim port of ModelOp.forward, unrolled at trace time -------
        tempP, numP, point, totalP = [], [], 0, 0
        tempT = []
        res = None
        for i in range(len(arch)):
            if i == 0:
                res = linear(s0, w_pre, b_pre, relu=False)   # preprocess0
                tempP.append(res); numP.append(i); totalP += 1
                res = op(i, res)
                if arch[i] == 1:
                    tempP.append(res); numP.append(i); totalP += 1
                else:
                    tempT.append(res); numP = []; tempP = []
            elif arch[i - 1] == 1:
                if arch[i] == 0:
                    res = sum(gated(totalP - len(numP) + j, tempP[j]) for j in numP)
                    res = op(i, res)
                    tempT.append(res); numP = []; tempP = []
                else:
                    res = op(i, res)
                    tempP.append(res); numP.append(i - point); totalP += 1
            elif arch[i] == 1:
                res = op(i, res)
                tempP.append(res); point = i; numP.append(i - point); totalP += 1
            else:
                res = sum(tempT)
                res = op(i, res)
                tempT.append(res)

        if len(numP) > 0 or len(tempP) > 0:
            res = sum(gated(totalP - len(numP) + j, tempP[j]) for j in numP)
        else:
            res = sum(tempT)

        # classifier (lane-dense, padded lanes carry NEG_BIG bias) + log-softmax
        logits = mm(res, w_cls) + b_cls
        m = jnp.max(logits, axis=1, keepdims=True)
        s = logits - m
        lse = jnp.log(jnp.sum(jnp.exp(s), axis=1, keepdims=True))
        o_ref[...] = (s - lse).astype(o_ref.dtype)   # unmasked 128-lane store

    return kernel


# ----------------------------- forward wrapper -----------------------------

def model_op_forward(params, arch, adj, s0):
    num_nodes, feat_dim = s0.shape
    hid_dim = params["w_pre"].shape[1]
    num_classes = params["w_cls"].shape[1]
    c_pad = LANE * pl.cdiv(num_classes, LANE)

    mlp_indices = tuple(i for i, e in enumerate(arch) if e == 0)

    # lane-dense classifier slab: zero weight columns + NEG_BIG bias for pads,
    # so padded logits vanish inside the in-kernel log-softmax.
    w_cls_p = jnp.pad(params["w_cls"], ((0, 0), (0, c_pad - num_classes)))
    b_cls_p = jnp.pad(params["b_cls"], ((0, 0), (0, c_pad - num_classes)),
                      constant_values=NEG_BIG)

    args = [adj, s0, params["w_pre"], params["b_pre"]]
    for i in mlp_indices:
        w, b = params["mlp"][i]
        args += [w, b]
    args += [w_cls_p, b_cls_p, params["gate"]]

    # Advisory cost hint so XLA schedules the single custom call sensibly.
    flops = 2 * num_nodes * feat_dim * hid_dim
    for e in arch:
        flops += 2 * num_nodes * (num_nodes if e == 1 else hid_dim) * hid_dim
    flops += 2 * num_nodes * hid_dim * c_pad
    transcendentals = num_nodes * (c_pad + 1) + len(arch) * hid_dim
    bytes_accessed = sum(int(a.size) * a.dtype.itemsize for a in args) \
        + num_nodes * c_pad * 4
    cost = pl.CostEstimate(flops=flops, transcendentals=transcendentals,
                           bytes_accessed=bytes_accessed)

    vmem_spec = pl.BlockSpec(memory_space=pltpu.MemorySpace.VMEM)
    smem_spec = pl.BlockSpec(memory_space=pltpu.MemorySpace.SMEM)
    in_specs = [vmem_spec] * (len(args) - 1) + [smem_spec]   # gate -> SMEM

    out_padded = pl.pallas_call(
        _make_fused_kernel(arch, mlp_indices),
        out_shape=jax.ShapeDtypeStruct((num_nodes, c_pad), jnp.float32),
        in_specs=in_specs,
        out_specs=vmem_spec,
        cost_estimate=cost,
    )(*args)
    return out_padded[:, :num_classes]


# ----------------------------- parameter init -----------------------------

def init_params(key, arch, feat_dim, hid_dim, num_classes):
    num_p = 1 + sum(1 for e in arch if e == 1)
    n_mlp = sum(1 for e in arch if e == 0)

    def lin_init(k, fan_in, fan_out):
        kw, kb = jax.random.split(k)
        bound = 1.0 / float(fan_in) ** 0.5       # nn.Linear default-like init
        w = jax.random.uniform(kw, (fan_in, fan_out), jnp.float32, -bound, bound)
        b = jax.random.uniform(kb, (1, fan_out), jnp.float32, -bound, bound)
        return w, b

    keys = jax.random.split(key, 3 + max(n_mlp, 1))
    params = {"mlp": {}}
    params["w_pre"], params["b_pre"] = lin_init(keys[0], feat_dim, hid_dim)
    params["w_cls"], params["b_cls"] = lin_init(keys[1], hid_dim, num_classes)
    params["gate"] = 1e-5 * jax.random.normal(keys[2], (num_p,), jnp.float32)
    nk = 3
    for i, e in enumerate(arch):
        if e == 0:
            params["mlp"][i] = lin_init(keys[nk], hid_dim, hid_dim)
            nk += 1
    return params


# ----------------------------- main -----------------------------

if __name__ == "__main__":
    num_nodes, feat_dim, hid_dim, num_classes = 16, 32, 32, 8
    arch = [1, 0, 1, 1]   # 1 -> Graph(adj @ x), 0 -> MLP(hid->hid, relu)

    key = jax.random.PRNGKey(0)
    k_adj, k_x, k_params = jax.random.split(key, 3)

    # deterministic row-normalized adjacency with self loops
    a = (jax.random.uniform(k_adj, (num_nodes, num_nodes)) > 0.7).astype(jnp.float32)
    a = jnp.maximum(a, a.T) + jnp.eye(num_nodes, dtype=jnp.float32)
    adj = a / jnp.sum(a, axis=1, keepdims=True)

    s0 = jax.random.normal(k_x, (num_nodes, feat_dim), jnp.float32)
    params = init_params(k_params, arch, feat_dim, hid_dim, num_classes)

    fwd = jax.jit(lambda p, adj_, x_: model_op_forward(p, arch, adj_, x_))
    logits = fwd(params, adj, s0)
    jax.block_until_ready(logits)
    assert logits.shape == (num_nodes, num_classes)
    assert bool(jnp.all(jnp.isfinite(logits)))
    print("KERNEL_OK")
</pallas_src>

<mosaic_0001>
module attributes {stable_mosaic.version = 11 : i64} {
  func.func @kernel(%arg0: memref<16x16xf32, #tpu.memory_space<vmem>>, %arg1: memref<16x32xf32, #tpu.memory_space<vmem>>, %arg2: memref<32x32xf32, #tpu.memory_space<vmem>>, %arg3: memref<1x32xf32, #tpu.memory_space<vmem>>, %arg4: memref<32x32xf32, #tpu.memory_space<vmem>>, %arg5: memref<1x32xf32, #tpu.memory_space<vmem>>, %arg6: memref<32x128xf32, #tpu.memory_space<vmem>>, %arg7: memref<1x128xf32, #tpu.memory_space<vmem>>, %arg8: memref<4xf32, #tpu.memory_space<smem>>, %arg9: memref<16x128xf32, #tpu.memory_space<vmem>>) attributes {dimension_semantics = [], scalar_prefetch = 0 : i64, scratch_operands = 0 : i64, tpu.core_type = #tpu.core_type<tc>} {
    %c0 = arith.constant 0 : index
    %c0_0 = arith.constant 0 : index
    %0 = vector.load %arg0[%c0, %c0_0] : memref<16x16xf32, #tpu.memory_space<vmem>>, vector<16x16xf32>
    %c0_1 = arith.constant 0 : index
    %c0_2 = arith.constant 0 : index
    %1 = vector.load %arg1[%c0_1, %c0_2] : memref<16x32xf32, #tpu.memory_space<vmem>>, vector<16x32xf32>
    %c0_3 = arith.constant 0 : index
    %c0_4 = arith.constant 0 : index
    %2 = vector.load %arg2[%c0_3, %c0_4] : memref<32x32xf32, #tpu.memory_space<vmem>>, vector<32x32xf32>
    %c0_5 = arith.constant 0 : index
    %c0_6 = arith.constant 0 : index
    %3 = vector.load %arg3[%c0_5, %c0_6] : memref<1x32xf32, #tpu.memory_space<vmem>>, vector<1x32xf32>
    %c0_7 = arith.constant 0 : index
    %c0_8 = arith.constant 0 : index
    %4 = vector.load %arg6[%c0_7, %c0_8] : memref<32x128xf32, #tpu.memory_space<vmem>>, vector<32x128xf32>
    %c0_9 = arith.constant 0 : index
    %c0_10 = arith.constant 0 : index
    %5 = vector.load %arg7[%c0_9, %c0_10] : memref<1x128xf32, #tpu.memory_space<vmem>>, vector<1x128xf32>
    %6 = arith.truncf %1 : vector<16x32xf32> to vector<16x32xbf16>
    %7 = arith.truncf %2 : vector<32x32xf32> to vector<32x32xbf16>
    %cst = arith.constant dense<0.000000e+00> : vector<16x32xf32>
    %8 = tpu.matmul %6, %7, %cst {dimension_numbers = #tpu.dot_dimension_numbers<[1], [0], [0], [1], [0, 0, 1, 1], [], []>} : vector<16x32xbf16>, vector<32x32xbf16>, vector<16x32xf32> -> vector<16x32xf32>
    %9 = vector.broadcast %3 : vector<1x32xf32> to vector<16x32xf32>
    %10 = arith.addf %8, %9 : vector<16x32xf32>
    %c0_11 = arith.constant 0 : index
    %11 = memref.load %arg8[%c0_11] : memref<4xf32, #tpu.memory_space<smem>>
    %cst_12 = arith.constant 0.000000e+00 : f32
    %12 = arith.subf %cst_12, %11 : f32
    %13 = vector.broadcast %12 : f32 to vector<1x32xf32>
    %14 = math.exp %13 : vector<1x32xf32>
    %cst_13 = arith.constant 1.000000e+00 : f32
    %15 = vector.broadcast %cst_13 : f32 to vector<1x32xf32>
    %16 = arith.addf %15, %14 : vector<1x32xf32>
    %cst_14 = arith.constant 1.000000e+00 : f32
    %17 = vector.broadcast %cst_14 : f32 to vector<1x32xf32>
    %18 = arith.divf %17, %16 : vector<1x32xf32>
    %19 = vector.broadcast %18 : vector<1x32xf32> to vector<16x32xf32>
    %20 = arith.mulf %19, %10 : vector<16x32xf32>
    %cst_15 = arith.constant 0.000000e+00 : f32
    %21 = vector.broadcast %cst_15 : f32 to vector<16x32xf32>
    %22 = arith.addf %21, %20 : vector<16x32xf32>
    %c0_16 = arith.constant 0 : index
    %23 = memref.load %arg8[%c0_16] : memref<4xf32, #tpu.memory_space<smem>>
    %cst_17 = arith.constant 0.000000e+00 : f32
    %24 = arith.subf %cst_17, %23 : f32
    %25 = vector.broadcast %24 : f32 to vector<1x32xf32>
    %26 = math.exp %25 : vector<1x32xf32>
    %cst_18 = arith.constant 1.000000e+00 : f32
    %27 = vector.broadcast %cst_18 : f32 to vector<1x32xf32>
    %28 = arith.addf %27, %26 : vector<1x32xf32>
    %cst_19 = arith.constant 1.000000e+00 : f32
    %29 = vector.broadcast %cst_19 : f32 to vector<1x32xf32>
    %30 = arith.divf %29, %28 : vector<1x32xf32>
    %31 = vector.broadcast %30 : vector<1x32xf32> to vector<16x32xf32>
    %32 = arith.mulf %31, %10 : vector<16x32xf32>
    %33 = arith.addf %22, %32 : vector<16x32xf32>
    %c0_20 = arith.constant 0 : index
    %c0_21 = arith.constant 0 : index
    %34 = vector.load %arg4[%c0_20, %c0_21] : memref<32x32xf32, #tpu.memory_space<vmem>>, vector<32x32xf32>
    %c0_22 = arith.constant 0 : index
    %c0_23 = arith.constant 0 : index
    %35 = vector.load %arg5[%c0_22, %c0_23] : memref<1x32xf32, #tpu.memory_space<vmem>>, vector<1x32xf32>
    %36 = arith.truncf %33 : vector<16x32xf32> to vector<16x32xbf16>
    %37 = arith.truncf %34 : vector<32x32xf32> to vector<32x32xbf16>
    %cst_24 = arith.constant dense<0.000000e+00> : vector<16x32xf32>
    %38 = tpu.matmul %36, %37, %cst_24 {dimension_numbers = #tpu.dot_dimension_numbers<[1], [0], [0], [1], [0, 0, 1, 1], [], []>} : vector<16x32xbf16>, vector<32x32xbf16>, vector<16x32xf32> -> vector<16x32xf32>
    %39 = vector.broadcast %35 : vector<1x32xf32> to vector<16x32xf32>
    %40 = arith.addf %38, %39 : vector<16x32xf32>
    %cst_25 = arith.constant 0.000000e+00 : f32
    %41 = vector.broadcast %cst_25 : f32 to vector<16x32xf32>
    %42 = arith.maximumf %40, %41 : vector<16x32xf32>
    %43 = arith.truncf %0 : vector<16x16xf32> to vector<16x16xbf16>
    %44 = arith.truncf %42 : vector<16x32xf32> to vector<16x32xbf16>
    %cst_26 = arith.constant dense<0.000000e+00> : vector<16x32xf32>
    %45 = tpu.matmul %43, %44, %cst_26 {dimension_numbers = #tpu.dot_dimension_numbers<[1], [0], [0], [1], [0, 0, 1, 1], [], []>} : vector<16x16xbf16>, vector<16x32xbf16>, vector<16x32xf32> -> vector<16x32xf32>
    %46 = arith.truncf %0 : vector<16x16xf32> to vector<16x16xbf16>
    %47 = arith.truncf %45 : vector<16x32xf32> to vector<16x32xbf16>
    %cst_27 = arith.constant dense<0.000000e+00> : vector<16x32xf32>
    %48 = tpu.matmul %46, %47, %cst_27 {dimension_numbers = #tpu.dot_dimension_numbers<[1], [0], [0], [1], [0, 0, 1, 1], [], []>} : vector<16x16xbf16>, vector<16x32xbf16>, vector<16x32xf32> -> vector<16x32xf32>
    %c2 = arith.constant 2 : index
    %49 = memref.load %arg8[%c2] : memref<4xf32, #tpu.memory_space<smem>>
    %cst_28 = arith.constant 0.000000e+00 : f32
    %50 = arith.subf %cst_28, %49 : f32
    %51 = vector.broadcast %50 : f32 to vector<1x32xf32>
    %52 = math.exp %51 : vector<1x32xf32>
    %cst_29 = arith.constant 1.000000e+00 : f32
    %53 = vector.broadcast %cst_29 : f32 to vector<1x32xf32>
    %54 = arith.addf %53, %52 : vector<1x32xf32>
    %cst_30 = arith.constant 1.000000e+00 : f32
    %55 = vector.broadcast %cst_30 : f32 to vector<1x32xf32>
    %56 = arith.divf %55, %54 : vector<1x32xf32>
    %57 = vector.broadcast %56 : vector<1x32xf32> to vector<16x32xf32>
    %58 = arith.mulf %57, %45 : vector<16x32xf32>
    %cst_31 = arith.constant 0.000000e+00 : f32
    %59 = vector.broadcast %cst_31 : f32 to vector<16x32xf32>
    %60 = arith.addf %59, %58 : vector<16x32xf32>
    %c3 = arith.constant 3 : index
    %61 = memref.load %arg8[%c3] : memref<4xf32, #tpu.memory_space<smem>>
    %cst_32 = arith.constant 0.000000e+00 : f32
    %62 = arith.subf %cst_32, %61 : f32
    %63 = vector.broadcast %62 : f32 to vector<1x32xf32>
    %64 = math.exp %63 : vector<1x32xf32>
    %cst_33 = arith.constant 1.000000e+00 : f32
    %65 = vector.broadcast %cst_33 : f32 to vector<1x32xf32>
    %66 = arith.addf %65, %64 : vector<1x32xf32>
    %cst_34 = arith.constant 1.000000e+00 : f32
    %67 = vector.broadcast %cst_34 : f32 to vector<1x32xf32>
    %68 = arith.divf %67, %66 : vector<1x32xf32>
    %69 = vector.broadcast %68 : vector<1x32xf32> to vector<16x32xf32>
    %70 = arith.mulf %69, %48 : vector<16x32xf32>
    %71 = arith.addf %60, %70 : vector<16x32xf32>
    %72 = arith.truncf %71 : vector<16x32xf32> to vector<16x32xbf16>
    %73 = arith.truncf %4 : vector<32x128xf32> to vector<32x128xbf16>
    %cst_35 = arith.constant dense<0.000000e+00> : vector<16x128xf32>
    %74 = tpu.matmul %72, %73, %cst_35 {dimension_numbers = #tpu.dot_dimension_numbers<[1], [0], [0], [1], [0, 0, 1, 1], [], []>} : vector<16x32xbf16>, vector<32x128xbf16>, vector<16x128xf32> -> vector<16x128xf32>
    %75 = vector.broadcast %5 : vector<1x128xf32> to vector<16x128xf32>
    %76 = arith.addf %74, %75 : vector<16x128xf32>
    %cst_36 = arith.constant dense<0xFF800000> : vector<16xf32>
    %77 = vector.multi_reduction <maximumf>, %76, %cst_36 [1] : vector<16x128xf32> to vector<16xf32>
    %78 = vector.shape_cast %77 : vector<16xf32> to vector<16x1xf32>
    %79 = vector.broadcast %78 : vector<16x1xf32> to vector<16x128xf32>
    %80 = arith.subf %76, %79 : vector<16x128xf32>
    %81 = math.exp %80 : vector<16x128xf32>
    %cst_37 = arith.constant dense<0.000000e+00> : vector<16xf32>
    %82 = vector.multi_reduction <add>, %81, %cst_37 [1] : vector<16x128xf32> to vector<16xf32>
    %83 = vector.shape_cast %82 : vector<16xf32> to vector<16x1xf32>
    %84 = math.log %83 : vector<16x1xf32>
    %85 = vector.broadcast %84 : vector<16x1xf32> to vector<16x128xf32>
    %86 = arith.subf %80, %85 : vector<16x128xf32>
    %c0_38 = arith.constant 0 : index
    %c0_39 = arith.constant 0 : index
    %87 = vector.load %arg9[%c0_38, %c0_39] : memref<16x128xf32, #tpu.memory_space<vmem>>, vector<16x128xf32>
    tpu.vector_store %arg9[%c0_38, %c0_39], %86 {strides = array<i32>} : memref<16x128xf32, #tpu.memory_space<vmem>>, vector<16x128xf32>,
    return
  }
}

</mosaic_0001>

<llo_original>
// kernel: _lambda_.1
$region0: #{_lambda_.1}
  #allocation0 [shape = 'u32[]', space=smem, size = 0x4, offset = 0x4, fixed_abs, tag = 'smem constant byte address 0x4 - core index']
  #allocation1 [shape = 'u32[144,128]{1,0:T(1,128)}', space=vmem, size = 0x12000, scoped, tag = 'internal scratch']
  %s0 = inlined_call_operand.vmem [shape: f32[16,16], index: 0, kind: input, shape index: {}]
  %s1 = inlined_call_operand.vmem [shape: f32[16,32], index: 1, kind: input, shape index: {}]
  %s2 = inlined_call_operand.vmem [shape: f32[32,32], index: 2, kind: input, shape index: {}]
  %s3 = inlined_call_operand.vmem [shape: f32[1,32], index: 3, kind: input, shape index: {}]
  %s4 = inlined_call_operand.vmem [shape: f32[32,32], index: 4, kind: input, shape index: {}]
  %s5 = inlined_call_operand.vmem [shape: f32[1,32], index: 5, kind: input, shape index: {}]
  %s6 = inlined_call_operand.vmem [shape: f32[32,128], index: 6, kind: input, shape index: {}]
  %s7 = inlined_call_operand.vmem [shape: f32[1,128], index: 7, kind: input, shape index: {}]
  %s8 = inlined_call_operand.vmem [shape: f32[4], index: 8, kind: input, shape index: {}]
  %s9 = inlined_call_operand.vmem [shape: f32[16,128], index: 9, kind: output, shape index: {}]
  %s10 = sld [smem:[#allocation0]]
  $region50: #{_lambda_.1} parent=0
    _
  %s12 = ssub.s32 1, %s10
  %s13 = scalar_select 0, %s12, %s10
  $region1: #{_lambda_.1} parent=0
    #allocation2 [shape = 'u8[512]{0}', space=smem, size = 0x200, scoped, tag = 'input window, operand 8, single buffered']
    #allocation3 [shape = 's32[1]{0}', space=sflag, size = 0x4, scoped, tag = 'scoped memory for _lambda_.1']
    %14 = vsyncpa [#allocation3], 0
    // Predicated region
    $region2: #{_lambda_.1} parent=1 // pred_check
      _
    $region3: #{_lambda_.1} parent=1 // pred_check_branch
      %16 = sbr.rel (0) target = $region5
    $region4: #{_lambda_.1} parent=1 // pred_region
      _
    $region5: #{_lambda_.1} parent=1 // pred_fallthru
      _
    // Predicated region
    $region6: #{_lambda_.1} parent=1 // pred_check
      _
    $region7: #{_lambda_.1} parent=1 // pred_check_branch
      %18 = sbr.rel (0) target = $region9
    $region8: #{_lambda_.1} parent=1 // pred_region
      _
    $region9: #{_lambda_.1} parent=1 // pred_fallthru
      _
    // Predicated region
    $region10: #{_lambda_.1} parent=1 // pred_check
      _
    $region11: #{_lambda_.1} parent=1 // pred_check_branch
      %20 = sbr.rel (0) target = $region13
    $region12: #{_lambda_.1} parent=1 // pred_region
      _
    $region13: #{_lambda_.1} parent=1 // pred_fallthru
      _
    // Predicated region
    $region14: #{_lambda_.1} parent=1 // pred_check
      _
    $region15: #{_lambda_.1} parent=1 // pred_check_branch
      %22 = sbr.rel (0) target = $region17
    $region16: #{_lambda_.1} parent=1 // pred_region
      _
    $region17: #{_lambda_.1} parent=1 // pred_fallthru
      _
    // Predicated region
    $region18: #{_lambda_.1} parent=1 // pred_check
      _
    $region19: #{_lambda_.1} parent=1 // pred_check_branch
      %24 = sbr.rel (0) target = $region21
    $region20: #{_lambda_.1} parent=1 // pred_region
      _
    $region21: #{_lambda_.1} parent=1 // pred_fallthru
      _
    // Predicated region
    $region22: #{_lambda_.1} parent=1 // pred_check
      _
    $region23: #{_lambda_.1} parent=1 // pred_check_branch
      %26 = sbr.rel (0) target = $region25
    $region24: #{_lambda_.1} parent=1 // pred_region
      _
    $region25: #{_lambda_.1} parent=1 // pred_fallthru
      _
    // Predicated region
    $region26: #{_lambda_.1} parent=1 // pred_check
      _
    $region27: #{_lambda_.1} parent=1 // pred_check_branch
      %28 = sbr.rel (0) target = $region29
    $region28: #{_lambda_.1} parent=1 // pred_region
      _
    $region29: #{_lambda_.1} parent=1 // pred_fallthru
      _
    // Predicated region
    $region30: #{_lambda_.1} parent=1 // pred_check
      _
    $region31: #{_lambda_.1} parent=1 // pred_check_branch
      %30 = sbr.rel (0) target = $region33
    $region32: #{_lambda_.1} parent=1 // pred_region
      _
    $region33: #{_lambda_.1} parent=1 // pred_fallthru
      _
    // Predicated region
    $region34: #{_lambda_.1} parent=1 // pred_check
      _
    $region35: #{_lambda_.1} parent=1 // pred_check_branch
      %32 = sbr.rel (0) target = $region37
    $region36: #{_lambda_.1} parent=1 // pred_region
      %s34 = ssub.s32 16, 16
      %35 = vsyncadd [#allocation3], %s34
      %s37 = sshll.u32 %s8, 4
      %s38 = int_to_ptr.vmem [resolvable:$true] %s37
      %40 = dma.vmem_to_smem %s38, 16, [#allocation2], [#allocation3]
    $region37: #{_lambda_.1} parent=1 // pred_fallthru
      _
    // Predicated region
    $region38: #{_lambda_.1} parent=1 // pred_check
      _
    $region39: #{_lambda_.1} parent=1 // pred_check_branch
      %42 = sbr.rel (0) target = $region41
    $region40: #{_lambda_.1} parent=1 // pred_region
      %43 = dma.done [#allocation3], 16
    $region41: #{_lambda_.1} parent=1 // pred_fallthru
      _
    %44 = sfence
    %v46 = vld [vmem:[%s0] sm:$0xff]
    %v47 = vld [vmem:[%s0 + $0x8] sm:$0xff]
    %v48 = vld [vmem:[%s1] sm:$0xff]
    %v49 = vld [vmem:[%s1 + $0x8] sm:$0xff]
    %v50 = vld [vmem:[%s2] sm:$0xff]
    %v51 = vld [vmem:[%s2 + $0x8] sm:$0xff]
    %v52 = vld [vmem:[%s2 + $0x10] sm:$0xff]
    %v53 = vld [vmem:[%s2 + $0x18] sm:$0xff]
    %v54 = vld [vmem:[%s3] sm:$0x1]
    %v55 = vld [vmem:[%s6] sm:$0xff]
    %v56 = vld [vmem:[%s6 + $0x8] sm:$0xff]
    %v57 = vld [vmem:[%s6 + $0x10] sm:$0xff]
    %v58 = vld [vmem:[%s6 + $0x18] sm:$0xff]
    %v59 = vld [vmem:[%s7] sm:$0x1]
    %v60 = vpack.c.bf16 %v49, %v48
    %v61 = vpack.c.bf16 %v51, %v50
    %v62 = vpack.c.bf16 %v53, %v52
    %v64 = vlaneseq
    %v65 = vshrl.u32 %v64, 7
    %v66 = vsub.s32 0, %v65
    %v67 = vrot.slane %v54, %v66
    %vm69 = vcmask 261120
    %v71 = vsel %vm69, %v60, 0
    %73 = vmatprep.subr.bf16.mxu0 0
    %74 = vmatpush1.bf16.msra.mxu0 %v61
    %75 = vmatprep.subr.bf16.mxu0 0
    %76 = vmatpush1.bf16.msra.mxu0 %v62
    %77 = vmatprep.subr.bf16.mxu0 0
    %78 = vmatpush1.bf16.msra.mxu0 0
    %79 = vmatprep.subr.bf16.mxu0 0
    %80 = vmatpush1.bf16.msra.mxu0 0
    %81 = vmatprep.subr.bf16.mxu0 0
    %82 = vmatpush1.bf16.msra.mxu0 0
    %83 = vmatprep.subr.bf16.mxu0 0
    %84 = vmatpush1.bf16.msra.mxu0 0
    %85 = vmatprep.subr.bf16.mxu0 0
    %86 = vmatpush1.bf16.msra.mxu0 0
    %87 = vmatprep.subr.bf16.mxu0 0
    %88 = vmatpush1.bf16.msra.mxu0 0
    %89 = vmatprep.subr.bf16.mxu0 0
    %90 = vmatpush1.bf16.msra.mxu0 0
    %91 = vmatprep.subr.bf16.mxu0 0
    %92 = vmatpush1.bf16.msra.mxu0 0
    %93 = vmatprep.subr.bf16.mxu0 0
    %94 = vmatpush1.bf16.msra.mxu0 0
    %95 = vmatprep.subr.bf16.mxu0 0
    %96 = vmatpush1.bf16.msra.mxu0 0
    %97 = vmatprep.subr.bf16.mxu0 0
    %98 = vmatpush1.bf16.msra.mxu0 0
    %99 = vmatprep.subr.bf16.mxu0 0
    %100 = vmatpush1.bf16.msra.mxu0 0
    %101 = vmatprep.subr.bf16.mxu0 0
    %102 = vmatpush1.bf16.msra.mxu0 0
    %103 = vmatprep.subr.bf16.mxu0 0
    %104 = vmatpush1.bf16.msra.mxu0 0
    %105 = vmatprep.mubr.bf16.mxu0 0
    %106 = vmatmul.mubr.bf16.gmra.mrb[0].mxu0 %v71
    %v107 = vpop.f32.mrb[0].mxu0
    %v108 = vadd.f32 %v67, %v107
    %v109 = vpop.f32.mrb[0].mxu0
    %v110 = vpop.f32.mrb[0].mxu0
    %v111 = vadd.f32 %v67, %v110
    %v112 = vpop.f32.mrb[0].mxu0
    %113 = vdwg.mxu0
    %s114 = sld [smem:[#allocation2]]
    %s115 = ssub.f32 0.0, %s114
    %v116 = vstv %s115
    %v117 = vmul.f32 %v116, 1.442695
    %v118 = vpow.pop %v117
    %v119 = vadd.f32 %v118, 1.0
    %v120 = vrcp.pop %v119
    %v121 = vmul.f32 1.0, %v120
    %v122 = vmul.f32 %v121, %v108
    %v123 = vmul.f32 %v121, %v111
    %v124 = vadd.f32 %v122, 0.0
    %v125 = vadd.f32 %v123, 0.0
    %v126 = vadd.f32 %v124, %v122
    %v127 = vadd.f32 %v125, %v123
    %v128 = vld [vmem:[%s4] sm:$0xff]
    %v129 = vld [vmem:[%s4 + $0x8] sm:$0xff]
    %v130 = vld [vmem:[%s4 + $0x10] sm:$0xff]
    %v131 = vld [vmem:[%s4 + $0x18] sm:$0xff]
    %v132 = vld [vmem:[%s5] sm:$0x1]
    %v133 = vpack.c.bf16 %v127, %v126
    %v134 = vpack.c.bf16 %v129, %v128
    %v135 = vpack.c.bf16 %v131, %v130
    %v137 = vlaneseq
    %v138 = vshrl.u32 %v137, 7
    %v139 = vsub.s32 0, %v138
    %v140 = vrot.slane %v132, %v139
    %v143 = vsel %vm69, %v133, 0
    %145 = vmatprep.subr.bf16.mxu0 0
    %146 = vmatpush1.bf16.msra.mxu0 %v134
    %147 = vmatprep.subr.bf16.mxu0 0
    %148 = vmatpush1.bf16.msra.mxu0 %v135
    %149 = vmatprep.subr.bf16.mxu0 0
    %150 = vmatpush1.bf16.msra.mxu0 0
    %151 = vmatprep.subr.bf16.mxu0 0
    %152 = vmatpush1.bf16.msra.mxu0 0
    %153 = vmatprep.subr.bf16.mxu0 0
    %154 = vmatpush1.bf16.msra.mxu0 0
    %155 = vmatprep.subr.bf16.mxu0 0
    %156 = vmatpush1.bf16.msra.mxu0 0
    %157 = vmatprep.subr.bf16.mxu0 0
    %158 = vmatpush1.bf16.msra.mxu0 0
    %159 = vmatprep.subr.bf16.mxu0 0
    %160 = vmatpush1.bf16.msra.mxu0 0
    %161 = vmatprep.subr.bf16.mxu0 0
    %162 = vmatpush1.bf16.msra.mxu0 0
    %163 = vmatprep.subr.bf16.mxu0 0
    %164 = vmatpush1.bf16.msra.mxu0 0
    %165 = vmatprep.subr.bf16.mxu0 0
    %166 = vmatpush1.bf16.msra.mxu0 0
    %167 = vmatprep.subr.bf16.mxu0 0
    %168 = vmatpush1.bf16.msra.mxu0 0
    %169 = vmatprep.subr.bf16.mxu0 0
    %170 = vmatpush1.bf16.msra.mxu0 0
    %171 = vmatprep.subr.bf16.mxu0 0
    %172 = vmatpush1.bf16.msra.mxu0 0
    %173 = vmatprep.subr.bf16.mxu0 0
    %174 = vmatpush1.bf16.msra.mxu0 0
    %175 = vmatprep.subr.bf16.mxu0 0
    %176 = vmatpush1.bf16.msra.mxu0 0
    %177 = vmatprep.mubr.bf16.mxu0 0
    %178 = vmatmul.mubr.bf16.gmra.mrb[0].mxu0 %v143
    %v179 = vpop.f32.mrb[0].mxu0
    %v180 = vadd.f32 %v140, %v179
    %v181 = vpop.f32.mrb[0].mxu0
    %v182 = vpop.f32.mrb[0].mxu0
    %v183 = vadd.f32 %v140, %v182
    %v184 = vpop.f32.mrb[0].mxu0
    %185 = vdwg.mxu0
    %v186 = vmax.f32 %v180, 0.0
    %v187 = vmax.f32 %v183, 0.0
    %v188 = vpack.c.bf16 %v47, %v46
    %v189 = vpack.c.bf16 %v187, %v186
    %vm190 = vcmask 130048
    %v192 = vsel %vm190, %v188, 0
    %194 = vmatprep.subr.bf16.mxu0 0
    %195 = vmatpush1.bf16.msra.mxu0 %v189
    %196 = vmatprep.subr.bf16.mxu0 0
    %197 = vmatpush1.bf16.msra.mxu0 0
    %198 = vmatprep.subr.bf16.mxu0 0
    %199 = vmatpush1.bf16.msra.mxu0 0
    %200 = vmatprep.subr.bf16.mxu0 0
    %201 = vmatpush1.bf16.msra.mxu0 0
    %202 = vmatprep.subr.bf16.mxu0 0
    %203 = vmatpush1.bf16.msra.mxu0 0
    %204 = vmatprep.subr.bf16.mxu0 0
    %205 = vmatpush1.bf16.msra.mxu0 0
    %206 = vmatprep.subr.bf16.mxu0 0
    %207 = vmatpush1.bf16.msra.mxu0 0
    %208 = vmatprep.subr.bf16.mxu0 0
    %209 = vmatpush1.bf16.msra.mxu0 0
    %210 = vmatprep.subr.bf16.mxu0 0
    %211 = vmatpush1.bf16.msra.mxu0 0
    %212 = vmatprep.subr.bf16.mxu0 0
    %213 = vmatpush1.bf16.msra.mxu0 0
    %214 = vmatprep.subr.bf16.mxu0 0
    %215 = vmatpush1.bf16.msra.mxu0 0
    %216 = vmatprep.subr.bf16.mxu0 0
    %217 = vmatpush1.bf16.msra.mxu0 0
    %218 = vmatprep.subr.bf16.mxu0 0
    %219 = vmatpush1.bf16.msra.mxu0 0
    %220 = vmatprep.subr.bf16.mxu0 0
    %221 = vmatpush1.bf16.msra.mxu0 0
    %222 = vmatprep.subr.bf16.mxu0 0
    %223 = vmatpush1.bf16.msra.mxu0 0
    %224 = vmatprep.subr.bf16.mxu0 0
    %225 = vmatpush1.bf16.msra.mxu0 0
    %226 = vmatprep.mubr.bf16.mxu0 0
    %227 = vmatmul.mubr.bf16.gmra.mrb[0].mxu0 %v192
    %v228 = vpop.f32.mrb[0].mxu0
    %v229 = vadd.f32 0.0, %v228
    %v230 = vpop.f32.mrb[0].mxu0
    %v231 = vpop.f32.mrb[0].mxu0
    %v232 = vadd.f32 0.0, %v231
    %v233 = vpop.f32.mrb[0].mxu0
    %234 = vdwg.mxu0
    %v235 = vpack.c.bf16 %v232, %v229
    %236 = vmatprep.subr.bf16.mxu0 0
    %237 = vmatpush1.bf16.msra.mxu0 %v235
    %238 = vmatprep.subr.bf16.mxu0 0
    %239 = vmatpush1.bf16.msra.mxu0 0
    %240 = vmatprep.subr.bf16.mxu0 0
    %241 = vmatpush1.bf16.msra.mxu0 0
    %242 = vmatprep.subr.bf16.mxu0 0
    %243 = vmatpush1.bf16.msra.mxu0 0
    %244 = vmatprep.subr.bf16.mxu0 0
    %245 = vmatpush1.bf16.msra.mxu0 0
    %246 = vmatprep.subr.bf16.mxu0 0
    %247 = vmatpush1.bf16.msra.mxu0 0
    %248 = vmatprep.subr.bf16.mxu0 0
    %249 = vmatpush1.bf16.msra.mxu0 0
    %250 = vmatprep.subr.bf16.mxu0 0
    %251 = vmatpush1.bf16.msra.mxu0 0
    %252 = vmatprep.subr.bf16.mxu0 0
    %253 = vmatpush1.bf16.msra.mxu0 0
    %254 = vmatprep.subr.bf16.mxu0 0
    %255 = vmatpush1.bf16.msra.mxu0 0
    %256 = vmatprep.subr.bf16.mxu0 0
    %257 = vmatpush1.bf16.msra.mxu0 0
    %258 = vmatprep.subr.bf16.mxu0 0
    %259 = vmatpush1.bf16.msra.mxu0 0
    %260 = vmatprep.subr.bf16.mxu0 0
    %261 = vmatpush1.bf16.msra.mxu0 0
    %262 = vmatprep.subr.bf16.mxu0 0
    %263 = vmatpush1.bf16.msra.mxu0 0
    %264 = vmatprep.subr.bf16.mxu0 0
    %265 = vmatpush1.bf16.msra.mxu0 0
    %266 = vmatprep.subr.bf16.mxu0 0
    %267 = vmatpush1.bf16.msra.mxu0 0
    %268 = vmatprep.mubr.bf16.mxu0 0
    %269 = vmatmul.mubr.bf16.gmra.mrb[0].mxu0 %v192
    %v270 = vpop.f32.mrb[0].mxu0
    %v271 = vadd.f32 0.0, %v270
    %v272 = vpop.f32.mrb[0].mxu0
    %v273 = vpop.f32.mrb[0].mxu0
    %v274 = vadd.f32 0.0, %v273
    %v275 = vpop.f32.mrb[0].mxu0
    %276 = vdwg.mxu0
    %s277 = sld [smem:[#allocation2 + $0x2]]
    %s278 = ssub.f32 0.0, %s277
    %v279 = vstv %s278
    %v280 = vmul.f32 %v279, 1.442695
    %v281 = vpow.pop %v280
    %v282 = vadd.f32 %v281, 1.0
    %v283 = vrcp.pop %v282
    %v284 = vmul.f32 1.0, %v283
    %v285 = vmul.f32 %v284, %v229
    %v286 = vmul.f32 %v284, %v232
    %v287 = vadd.f32 %v285, 0.0
    %v288 = vadd.f32 %v286, 0.0
    %s289 = sld [smem:[#allocation2 + $0x3]]
    %s290 = ssub.f32 0.0, %s289
    %v291 = vstv %s290
    %v292 = vmul.f32 %v291, 1.442695
    %v293 = vpow.pop %v292
    %v294 = vadd.f32 %v293, 1.0
    %v295 = vrcp.pop %v294
    %v296 = vmul.f32 1.0, %v295
    %v297 = vmul.f32 %v296, %v271
    %v298 = vmul.f32 %v296, %v274
    %v299 = vadd.f32 %v287, %v297
    %v300 = vadd.f32 %v288, %v298
    %v301 = vpack.c.bf16 %v300, %v299
    %v302 = vpack.c.bf16 %v56, %v55
    %v303 = vpack.c.bf16 %v58, %v57
    %v305 = vlaneseq
    %v306 = vshrl.u32 %v305, 7
    %v307 = vsub.s32 0, %v306
    %v308 = vrot.slane %v59, %v307
    %v311 = vsel %vm69, %v301, 0
    %313 = vmatprep.subr.bf16.mxu0 0
    %314 = vmatpush1.bf16.msra.mxu0 %v302
    %315 = vmatprep.subr.bf16.mxu0 0
    %316 = vmatpush1.bf16.msra.mxu0 %v303
    %317 = vmatprep.subr.bf16.mxu0 0
    %318 = vmatpush1.bf16.msra.mxu0 0
    %319 = vmatprep.subr.bf16.mxu0 0
    %320 = vmatpush1.bf16.msra.mxu0 0
    %321 = vmatprep.subr.bf16.mxu0 0
    %322 = vmatpush1.bf16.msra.mxu0 0
    %323 = vmatprep.subr.bf16.mxu0 0
    %324 = vmatpush1.bf16.msra.mxu0 0
    %325 = vmatprep.subr.bf16.mxu0 0
    %326 = vmatpush1.bf16.msra.mxu0 0
    %327 = vmatprep.subr.bf16.mxu0 0
    %328 = vmatpush1.bf16.msra.mxu0 0
    %329 = vmatprep.subr.bf16.mxu0 0
    %330 = vmatpush1.bf16.msra.mxu0 0
    %331 = vmatprep.subr.bf16.mxu0 0
    %332 = vmatpush1.bf16.msra.mxu0 0
    %333 = vmatprep.subr.bf16.mxu0 0
    %334 = vmatpush1.bf16.msra.mxu0 0
    %335 = vmatprep.subr.bf16.mxu0 0
    %336 = vmatpush1.bf16.msra.mxu0 0
    %337 = vmatprep.subr.bf16.mxu0 0
    %338 = vmatpush1.bf16.msra.mxu0 0
    %339 = vmatprep.subr.bf16.mxu0 0
    %340 = vmatpush1.bf16.msra.mxu0 0
    %341 = vmatprep.subr.bf16.mxu0 0
    %342 = vmatpush1.bf16.msra.mxu0 0
    %343 = vmatprep.subr.bf16.mxu0 0
    %344 = vmatpush1.bf16.msra.mxu0 0
    %345 = vmatprep.mubr.bf16.mxu0 0
    %346 = vmatmul.mubr.bf16.gmra.mrb[0].mxu0 %v311
    %v347 = vpop.f32.mrb[0].mxu0
    %v348 = vadd.f32 %v308, %v347
    %v349 = vpop.f32.mrb[0].mxu0
    %v350 = vpop.f32.mrb[0].mxu0
    %v351 = vadd.f32 %v308, %v350
    %v352 = vpop.f32.mrb[0].mxu0
    %353 = vdwg.mxu0
    %354 = vmax.xlane.f32.xlu0 %v348
    %v355 = vpop.xlane.xlu0 %354
    %356 = vmax.xlane.f32.xlu0 %v351
    %v357 = vpop.xlane.xlu0 %356
    %v358 = vsub.f32 %v348, %v355
    %v359 = vsub.f32 %v351, %v357
    %v360 = vmul.f32 %v358, 1.442695
    %v361 = vpow.pop %v360
    %v362 = vmul.f32 %v359, 1.442695
    %v363 = vpow.pop %v362
    %364 = vadd.xlane.f32.xlu0 %v361
    %v365 = vpop.xlane.xlu0 %364
    %366 = vadd.xlane.f32.xlu0 %v363
    %v367 = vpop.xlane.xlu0 %366
    %v368 = vlog2.pop %v365
    %v369 = vmul.f32 %v368, 0.6931472
    %v370 = vlog2.pop %v367
    %v371 = vmul.f32 %v370, 0.6931472
    %v372 = vsub.f32 %v358, %v369
    %v373 = vsub.f32 %v359, %v371
    %374 = vst [vmem:[%s9] sm:$0xff] %v372
    %375 = vst [vmem:[%s9 + $0x8] sm:$0xff] %v373
    // Predicated region
    $region42: #{_lambda_.1} parent=1 // pred_check
      _
    $region43: #{_lambda_.1} parent=1 // pred_check_branch
      %377 = sbr.rel (0) target = $region45
    $region44: #{_lambda_.1} parent=1 // pred_region
      _
    $region45: #{_lambda_.1} parent=1 // pred_fallthru
      _
    // Predicated region
    $region46: #{_lambda_.1} parent=1 // pred_check
      _
    $region47: #{_lambda_.1} parent=1 // pred_check_branch
      %379 = sbr.rel (0) target = $region49
    $region48: #{_lambda_.1} parent=1 // pred_region
      _
    $region49: #{_lambda_.1} parent=1 // pred_fallthru
      _
    %380 = vsyncpa [#allocation3], 1

</llo_original>
